<compile_context>
chip_gen: v7x
topology: tpu7x:2x2x1
jax: 0.10.0
libtpu: 0.0.40
codegen_flags: <defaults>
</compile_context>

<pallas_src>
import jax
import jax.numpy as jnp
from jax import lax
from jax.experimental import pallas as pl
from jax.experimental.pallas import tpu as pltpu

SMOOTH = 1e-05
LANES = 128       # lane width (last dim of every block)
SUB = 8           # sublane height of each partial-sum accumulator
BLK_R_MAX = 4096  # max rows per grid step: 4096*128*4B = 2 MiB / f32 input / step
CHUNK_R = 256     # rows reduced per in-kernel loop iteration
GRP = 4           # independent (8,128) accumulators per reduced quantity


def _sigmoid(x):
    # One EUP push (tanh) + 3 cheap VALU ops; numerically equivalent to
    # 1/(1+exp(-x)) (this is XLA's own logistic expansion) and strictly
    # cheaper than exp + reciprocal (2 EUP pushes / exact-divide expansion).
    return 0.5 * (jnp.tanh(0.5 * x) + 1.0)


def _dice_partial_kernel(x_ref, t_ref, out_ref):
    """Per-block partials: out_ref[0,0] = sum(sig(x)*t), out_ref[0,1] =
    sum(sig(x)+t), each kept as a lane-dense (8,128) array (final scalar
    combine + division happens in JAX)."""
    blk_r = x_ref.shape[0]

    def chunk_sums(r0, ch, grp):
        # Partial sums over `ch` rows starting at row r0, reduced to
        # (grp, 8, 128): grp independent add-chains, pure vreg-wise VALU adds
        # (no XLU work, no full-block temporaries).
        x = x_ref[pl.ds(r0, ch), :].astype(jnp.float32)
        t = t_ref[pl.ds(r0, ch), :].astype(jnp.float32)
        s = _sigmoid(x)
        it = jnp.sum((s * t).reshape(ch // (grp * SUB), grp, SUB, LANES), axis=0)
        st = jnp.sum((s + t).reshape(ch // (grp * SUB), grp, SUB, LANES), axis=0)
        return it, st

    n_full = blk_r // CHUNK_R
    rem = blk_r - n_full * CHUNK_R
    zeros = jnp.zeros((GRP, SUB, LANES), jnp.float32)

    if n_full > 0:
        def body(i, carry):
            ia, sa = carry
            r0 = pl.multiple_of(i * CHUNK_R, CHUNK_R)
            it, st = chunk_sums(r0, CHUNK_R, GRP)
            return ia + it, sa + st

        inter_g, st_g = lax.fori_loop(0, n_full, body, (zeros, zeros))
    else:
        inter_g, st_g = zeros, zeros

    inter = jnp.sum(inter_g, axis=0)    # collapse the GRP accumulators -> (8,128)
    st_sum = jnp.sum(st_g, axis=0)

    if rem > 0:  # static leftover chunk of this block (blk_r % CHUNK_R rows)
        it, st = chunk_sums(n_full * CHUNK_R, rem, 1)
        inter = inter + it[0]
        st_sum = st_sum + st[0]

    out_ref[0, 0] = inter
    out_ref[0, 1] = st_sum


def _dice_loss_jax(x_flat, t_flat, smooth):
    # Single fused pass over HBM; used only for inputs the kernel cannot view
    # as (rows, 128) without an extra HBM copy, and for tiny inputs.
    s = jax.nn.sigmoid(x_flat.astype(jnp.float32))
    t = t_flat.astype(jnp.float32)
    inter = jnp.sum(s * t)
    dice = (2.0 * inter + smooth) / (jnp.sum(s) + jnp.sum(t) + smooth)
    return 1.0 - dice


def _row_align(*dtypes):
    # Sublane alignment so blocks match the native (8/16/32, 128) tile of the
    # narrowest input dtype (f32 -> 8 rows, bf16 -> 16, int8/bool -> 32).
    a = SUB
    for d in dtypes:
        isz = jnp.dtype(d).itemsize
        a = max(a, SUB * max(1, 4 // isz))
    return a


def dice_loss(inputs, targets, smooth=SMOOTH):
    """Pallas DiceLoss: 1 - (2*sum(sig(x)*t) + eps) / (sum(sig(x)) + sum(t) + eps)."""
    x = inputs.reshape(-1)
    t = targets.reshape(-1)
    n_total = x.shape[0]

    row_align = _row_align(x.dtype, t.dtype)
    rows = n_total // LANES

    if n_total % LANES != 0 or rows < row_align:
        # Ragged / tiny case: a fused JAX reduction is one HBM pass, which
        # beats slicing off a 128-aligned prefix (an extra read+write of
        # essentially the whole tensor) just to feed the kernel.
        # TODO(synk): express this case in Pallas without the prefix copy
        # (needs efficient 1-D blocks or input fusion into the Mosaic call).
        return _dice_loss_jax(x, t, smooth)

    # Block heuristic: >= 2 blocks (so the "parallel" grid axis is split
    # across both v7x TensorCores), blocks as large as possible up to
    # BLK_R_MAX, aligned to the dtype's native sublane tile, with the
    # leftover full-row tail bounded to ~row_align*n_blocks rows (<~0.2%).
    tgt_blocks = max(2, -(-rows // BLK_R_MAX))
    blk_r = max(row_align,
                min(BLK_R_MAX, (rows // tgt_blocks // row_align) * row_align))
    n_blocks = rows // blk_r
    rows_main = n_blocks * blk_r

    x2 = x.reshape(rows, LANES)   # contiguous reshape: no data movement
    t2 = t.reshape(rows, LANES)

    parts = pl.pallas_call(
        _dice_partial_kernel,
        out_shape=jax.ShapeDtypeStruct((n_blocks, 2, SUB, LANES), jnp.float32),
        grid_spec=pltpu.PrefetchScalarGridSpec(
            num_scalar_prefetch=0,
            grid=(n_blocks,),
            in_specs=[
                pl.BlockSpec((blk_r, LANES), lambda i: (i, 0)),
                pl.BlockSpec((blk_r, LANES), lambda i: (i, 0)),
            ],
            out_specs=pl.BlockSpec((1, 2, SUB, LANES), lambda i: (i, 0, 0, 0)),
        ),
        compiler_params=pltpu.CompilerParams(
            dimension_semantics=("parallel",),   # v7x: shard blocks across both TCs
            vmem_limit_bytes=32 * 1024 * 1024,   # ~8 MiB of double-buffers + headroom
        ),
    )(x2, t2)

    inter = jnp.sum(parts[:, 0])
    st = jnp.sum(parts[:, 1])

    if rows_main < rows:
        # Bounded tail of full 128-lane rows (<= ~row_align*n_blocks rows).
        xt = x2[rows_main:].astype(jnp.float32)
        tt = t2[rows_main:].astype(jnp.float32)
        s = jax.nn.sigmoid(xt)
        inter = inter + jnp.sum(s * tt)
        st = st + jnp.sum(s) + jnp.sum(tt)

    dice = (2.0 * inter + smooth) / (st + smooth)
    return 1.0 - dice


def dice_loss_ref(inputs, targets, smooth=SMOOTH):
    return _dice_loss_jax(inputs.reshape(-1), targets.reshape(-1), smooth)


if __name__ == "__main__":
    key = jax.random.PRNGKey(0)
    k = jax.random.split(key, 8)

    def check(x, t, name):
        loss = jax.block_until_ready(dice_loss(x, t))
        ref = jax.block_until_ready(dice_loss_ref(x, t))
        assert jnp.allclose(loss, ref, atol=1e-5, rtol=1e-5), (name, loss, ref)

    # 1) NCHW logits / binary targets, as the PyTorch module would see them.
    x = jax.random.normal(k[0], (2, 4, 16, 16), dtype=jnp.float32)
    t = (jax.random.uniform(k[1], (2, 4, 16, 16)) > 0.5).astype(jnp.float32)
    check(x, t, "small_f32")

    # 2) Larger input: exercises the in-kernel chunked loop, the static rem
    #    chunk and the bounded full-row JAX tail (rows=850 -> blk_r=424).
    x = jax.random.normal(k[2], (2, 5, 85, 128), dtype=jnp.float32)
    t = (jax.random.uniform(k[3], (2, 5, 85, 128)) > 0.5).astype(jnp.float32)
    check(x, t, "large_f32")

    # 3) bf16 logits + int8 targets (kernel upcasts internally): halves /
    #    quarters HBM traffic on this purely bandwidth-bound op.
    x = jax.random.normal(k[4], (2, 4, 32, 32), dtype=jnp.bfloat16)
    t = (jax.random.uniform(k[5], (2, 4, 32, 32)) > 0.5).astype(jnp.int8)
    check(x, t, "bf16_int8")

    # 4) Ragged size (not a multiple of 128): copy-free fused JAX fallback.
    x = jax.random.normal(k[6], (2, 3, 16, 13), dtype=jnp.float32)
    t = (jax.random.uniform(k[7], (2, 3, 16, 13)) > 0.5).astype(jnp.float32)
    check(x, t, "ragged")

    print("KERNEL_OK")
</pallas_src>

<mosaic_0001>
module attributes {stable_mosaic.version = 11 : i64} {
  func.func @_dice_partial_kernel(%arg0: i32, %arg1: memref<8x128xf32, #tpu.memory_space<vmem>>, %arg2: memref<8x128xf32, #tpu.memory_space<vmem>>, %arg3: memref<1x2x8x128xf32, #tpu.memory_space<vmem>>) attributes {dimension_semantics = [#tpu.dimension_semantics<parallel>], iteration_bounds = array<i64: 2>, scalar_prefetch = 0 : i64, scratch_operands = 0 : i64, tpu.core_type = #tpu.core_type<tc>, window_params = [{transform_indices = @transform_0, window_bounds = array<i64: 8, 128>}, {transform_indices = @transform_1, window_bounds = array<i64: 8, 128>}, {transform_indices = @transform_2, window_bounds = array<i64: 1, 2, 8, 128>}]} {
    %cst = arith.constant 0.000000e+00 : f32
    %0 = vector.broadcast %cst : f32 to vector<4x8x128xf32>
    %cst_0 = arith.constant dense<0.000000e+00> : vector<8x128xf32>
    %1 = vector.multi_reduction <add>, %0, %cst_0 [0] : vector<4x8x128xf32> to vector<8x128xf32>
    %cst_1 = arith.constant dense<0.000000e+00> : vector<8x128xf32>
    %2 = vector.multi_reduction <add>, %0, %cst_1 [0] : vector<4x8x128xf32> to vector<8x128xf32>
    %c0 = arith.constant 0 : index
    %c0_2 = arith.constant 0 : index
    %3 = vector.load %arg1[%c0, %c0_2] : memref<8x128xf32, #tpu.memory_space<vmem>>, vector<8x128xf32>
    %c0_3 = arith.constant 0 : index
    %c0_4 = arith.constant 0 : index
    %4 = vector.load %arg2[%c0_3, %c0_4] : memref<8x128xf32, #tpu.memory_space<vmem>>, vector<8x128xf32>
    %cst_5 = arith.constant 5.000000e-01 : f32
    %5 = vector.broadcast %cst_5 : f32 to vector<8x128xf32>
    %6 = arith.mulf %5, %3 : vector<8x128xf32>
    %7 = math.tanh %6 : vector<8x128xf32>
    %cst_6 = arith.constant 1.000000e+00 : f32
    %8 = vector.broadcast %cst_6 : f32 to vector<8x128xf32>
    %9 = arith.addf %7, %8 : vector<8x128xf32>
    %cst_7 = arith.constant 5.000000e-01 : f32
    %10 = vector.broadcast %cst_7 : f32 to vector<8x128xf32>
    %11 = arith.mulf %10, %9 : vector<8x128xf32>
    %12 = arith.mulf %11, %4 : vector<8x128xf32>
    %13 = vector.shape_cast %12 : vector<8x128xf32> to vector<1x1x8x128xf32>
    %cst_8 = arith.constant dense<0.000000e+00> : vector<1x8x128xf32>
    %14 = vector.multi_reduction <add>, %13, %cst_8 [0] : vector<1x1x8x128xf32> to vector<1x8x128xf32>
    %15 = arith.addf %11, %4 : vector<8x128xf32>
    %16 = vector.shape_cast %15 : vector<8x128xf32> to vector<1x1x8x128xf32>
    %cst_9 = arith.constant dense<0.000000e+00> : vector<1x8x128xf32>
    %17 = vector.multi_reduction <add>, %16, %cst_9 [0] : vector<1x1x8x128xf32> to vector<1x8x128xf32>
    %18 = vector.shape_cast %14 : vector<1x8x128xf32> to vector<8x128xf32>
    %19 = arith.addf %1, %18 : vector<8x128xf32>
    %20 = vector.shape_cast %17 : vector<1x8x128xf32> to vector<8x128xf32>
    %21 = arith.addf %2, %20 : vector<8x128xf32>
    %c0_10 = arith.constant 0 : index
    %c0_11 = arith.constant 0 : index
    %c0_12 = arith.constant 0 : index
    %c0_13 = arith.constant 0 : index
    %22 = vector.load %arg3[%c0_10, %c0_11, %c0_12, %c0_13] : memref<1x2x8x128xf32, #tpu.memory_space<vmem>>, vector<1x1x8x128xf32>
    %23 = vector.shape_cast %22 : vector<1x1x8x128xf32> to vector<8x128xf32>
    %24 = vector.shape_cast %19 : vector<8x128xf32> to vector<1x1x8x128xf32>
    tpu.vector_store %arg3[%c0_10, %c0_11, %c0_12, %c0_13], %24 {strides = array<i32>} : memref<1x2x8x128xf32, #tpu.memory_space<vmem>>, vector<1x1x8x128xf32>,
    %c0_14 = arith.constant 0 : index
    %c1 = arith.constant 1 : index
    %c0_15 = arith.constant 0 : index
    %c0_16 = arith.constant 0 : index
    %25 = vector.load %arg3[%c0_14, %c1, %c0_15, %c0_16] : memref<1x2x8x128xf32, #tpu.memory_space<vmem>>, vector<1x1x8x128xf32>
    %26 = vector.shape_cast %25 : vector<1x1x8x128xf32> to vector<8x128xf32>
    %27 = vector.shape_cast %21 : vector<8x128xf32> to vector<1x1x8x128xf32>
    tpu.vector_store %arg3[%c0_14, %c1, %c0_15, %c0_16], %27 {strides = array<i32>} : memref<1x2x8x128xf32, #tpu.memory_space<vmem>>, vector<1x1x8x128xf32>,
    return
  }
  func.func @transform_0(%arg0: i32) -> (i32, i32) {
    %c0_i32 = arith.constant 0 : i32
    %c0_i32_0 = arith.constant 0 : i32
    return %arg0, %c0_i32 : i32, i32
  }
  func.func @transform_1(%arg0: i32) -> (i32, i32) {
    %c0_i32 = arith.constant 0 : i32
    %c0_i32_0 = arith.constant 0 : i32
    return %arg0, %c0_i32 : i32, i32
  }
  func.func @transform_2(%arg0: i32) -> (i32, i32, i32, i32) {
    %c0_i32 = arith.constant 0 : i32
    %c0_i32_0 = arith.constant 0 : i32
    %c0_i32_1 = arith.constant 0 : i32
    %c0_i32_2 = arith.constant 0 : i32
    return %arg0, %c0_i32, %c0_i32_0, %c0_i32_1 : i32, i32, i32, i32
  }
}

</mosaic_0001>

<llo_original>
// kernel: tpu_custom_call.1
$region0: #{tpu_custom_call.1}
  #allocation0 [shape = 'u32[]', space=smem, size = 0x4, offset = 0x4, fixed_abs, tag = 'smem constant byte address 0x4 - core index']
  #allocation1 [shape = 'u32[144,128]{1,0:T(1,128)}', space=vmem, size = 0x12000, scoped, tag = 'internal scratch']
  %s0 = inlined_call_operand.hbm [shape: f32[16,128], index: 0, kind: input, shape index: {}]
  %s1 = inlined_call_operand.hbm [shape: f32[16,128], index: 1, kind: input, shape index: {}]
  %s2 = inlined_call_operand.hbm [shape: f32[2,2,8,128], index: 2, kind: output, shape index: {}]
  %s3 = sld [smem:[#allocation0]]
  $region49: #{tpu_custom_call.1} parent=0
    _
  %s5 = ssub.s32 1, %s3
  %s6 = scalar_select 0, %s5, %s3
  $region1: #{tpu_custom_call.1} parent=0
    #allocation2 [shape = 'u8[8192]{0}', space=vmem, size = 0x2000, scoped, tag = 'input window, operand 0']
    #allocation3 [shape = 's32[2]{0}', space=sflag, size = 0x8, scoped, tag = 'scoped memory for tpu_custom_call.1']
    #allocation4 [shape = 's32[2]{0}', space=sflag, size = 0x8, scoped, tag = 'scoped memory for tpu_custom_call.1']
    #allocation5 [shape = 'u8[8192]{0}', space=vmem, size = 0x2000, scoped, tag = 'input window, operand 1']
    #allocation6 [shape = 's32[2]{0}', space=sflag, size = 0x8, scoped, tag = 'scoped memory for tpu_custom_call.1']
    #allocation7 [shape = 'u8[16384]{0}', space=vmem, size = 0x4000, scoped, tag = 'output window, operand 0']
    %7 = vsyncpa [#allocation3], 0
    %s8 = scalar_lea.sflag [#allocation3], 1
    %9 = vsyncpa %s8, 0
    %10 = vsyncpa [#allocation6], 0
    %s11 = scalar_lea.sflag [#allocation6], 1
    %12 = vsyncpa %s11, 0
    %13 = vsyncpa [#allocation4], 0
    %s14 = scalar_lea.sflag [#allocation4], 1
    %15 = vsyncpa %s14, 0
    loop: start=0, step=1, limit=4
    $region2: #{tpu_custom_call.1} parent=1 // loop_pre_header
      _
    $region3: #{tpu_custom_call.1} parent=1 // loop_header
      %s17 = sphi 0, %s21
      %p18 = scmp.ge.s32.totalorder %s17, 4
      %s27 = sphi 0, %s29
      %s30 = sphi 0, %s27
      %s31 = sphi 0, %s30
      %s47 = sphi 0, %s31
      %s53 = sphi 0, %s55
      %s56 = sphi 0, %s53
      %s57 = sphi 0, %s56
      %s73 = sphi 0, %s57
      %s79 = sphi 0, %s81
      %s82 = sphi 0, %s79
      %s83 = sphi 0, %s82
      %s99 = sphi 0, %s83
    $region4: #{tpu_custom_call.1} parent=1 // loop_header_branch
      %20 = sbr.rel (%p18) target = $region8
    $region5: #{tpu_custom_call.1} parent=1 // loop_body
      %s22 = ssub.s32 %s17, 1
      %s23 = ssub.s32 %s17, 2
      %s24 = sadd.s32 %s17, 1
      %s25 = ssub.s32 %s17, %s24
      %p26 = scmp.eq.s32.totalorder %s25, 0
      %s28 = sadd.s32 %s27, 1
      %s29 = scalar_select %p26, %s27, %s28
      %p32 = pneg %p26
      %p33 = scmp.eq.s32.totalorder %s17, 1
      %p34 = por %p32, %p33
      %p35 = scmp.ne.s32.totalorder %s27, %s30
      %p36 = scmp.eq.s32.totalorder %s17, 0
      %p37 = por %p35, %p36
      %p38 = scmp.ne.s32.totalorder %s27, %s30
      %p39 = scmp.eq.s32.totalorder %s22, 1
      %p40 = por %p38, %p39
      %p41 = scmp.ne.s32.totalorder %s30, %s31
      %p42 = scmp.eq.s32.totalorder %s22, 0
      %p43 = por %p41, %p42
      %p44 = scmp.ne.s32.totalorder %s30, %s31
      %p45 = scmp.eq.s32.totalorder %s23, 1
      %p46 = por %p44, %p45
      %p48 = scmp.ne.s32.totalorder %s31, %s47
      %p49 = scmp.eq.s32.totalorder %s23, 0
      %p50 = por %p48, %p49
      %s51 = ssub.s32 %s17, %s24
      %p52 = scmp.eq.s32.totalorder %s51, 0
      %s54 = sadd.s32 %s53, 1
      %s55 = scalar_select %p52, %s53, %s54
      %p58 = pneg %p52
      %p59 = scmp.eq.s32.totalorder %s17, 1
      %p60 = por %p58, %p59
      %p61 = scmp.ne.s32.totalorder %s53, %s56
      %p62 = scmp.eq.s32.totalorder %s17, 0
      %p63 = por %p61, %p62
      %p64 = scmp.ne.s32.totalorder %s53, %s56
      %p65 = scmp.eq.s32.totalorder %s22, 1
      %p66 = por %p64, %p65
      %p67 = scmp.ne.s32.totalorder %s56, %s57
      %p68 = scmp.eq.s32.totalorder %s22, 0
      %p69 = por %p67, %p68
      %p70 = scmp.ne.s32.totalorder %s56, %s57
      %p71 = scmp.eq.s32.totalorder %s23, 1
      %p72 = por %p70, %p71
      %p74 = scmp.ne.s32.totalorder %s57, %s73
      %p75 = scmp.eq.s32.totalorder %s23, 0
      %p76 = por %p74, %p75
      %s77 = ssub.s32 %s17, %s24
      %p78 = scmp.eq.s32.totalorder %s77, 0
      %s80 = sadd.s32 %s79, 1
      %s81 = scalar_select %p78, %s79, %s80
      %p84 = pneg %p78
      %p85 = scmp.eq.s32.totalorder %s17, 1
      %p86 = por %p84, %p85
      %p87 = scmp.ne.s32.totalorder %s79, %s82
      %p88 = scmp.eq.s32.totalorder %s17, 0
      %p89 = por %p87, %p88
      %p90 = scmp.ne.s32.totalorder %s79, %s82
      %p91 = scmp.eq.s32.totalorder %s22, 1
      %p92 = por %p90, %p91
      %p93 = scmp.ne.s32.totalorder %s82, %s83
      %p94 = scmp.eq.s32.totalorder %s22, 0
      %p95 = por %p93, %p94
      %p96 = scmp.ne.s32.totalorder %s82, %s83
      %p97 = scmp.eq.s32.totalorder %s23, 1
      %p98 = por %p96, %p97
      %p100 = scmp.ne.s32.totalorder %s83, %s99
      %p101 = scmp.eq.s32.totalorder %s23, 0
      %p102 = por %p100, %p101
      %p103 = scmp.le.s32.totalorder 1, %s17
      %p104 = scmp.lt.s32.totalorder %s17, 3
      %p105 = pnand %p103, %p104
      %p106 = pneg %p105
      // Predicated region
      $region9: #{tpu_custom_call.1} parent=5 // pred_check
        _
      $region10: #{tpu_custom_call.1} parent=5 // pred_check_branch
        %108 = sbr.rel (%p105) target = $region12
      $region11: #{tpu_custom_call.1} parent=5 // pred_region
        %s109 = ssub.s32 %s17, 1
      $region12: #{tpu_custom_call.1} parent=5 // pred_fallthru
        _
      %p110 = scmp.lt.s32.totalorder %s17, 2
      // Predicated region
      $region13: #{tpu_custom_call.1} parent=5 // pred_check
        %p111 = pneg %p110
      $region14: #{tpu_custom_call.1} parent=5 // pred_check_branch
        %113 = sbr.rel (%p111) target = $region16
      $region15: #{tpu_custom_call.1} parent=5 // pred_region
        // Predicated region
        $region17: #{tpu_custom_call.1} parent=15 // pred_check
          %p114 = pneg %p37
        $region18: #{tpu_custom_call.1} parent=15 // pred_check_branch
          %116 = sbr.rel (%p114) target = $region20
        $region19: #{tpu_custom_call.1} parent=15 // pred_region
          %s117 = sand.u32 %s27, 1
          %s118 = scalar_lea.sflag [#allocation3], %s117
          %s119 = sand.u32 %s27, 1
          %s120 = smul.addr %s119, 8
          %s121 = scalar_lea.vmem [#allocation2], %s120
          %s123 = ssub.s32 128, 128
          %124 = vsyncadd %s118, %s123
          %s125 = smul.addr %s17, 128
          %s126 = scalar_lea.hbm %s0, %s125
          %s128 = sshll.u32 %s121, 4
          %s129 = int_to_ptr.vmem [resolvable:$true] %s128
          %131 = dma.hbm_to_vmem [thread:$0]  %s126, 128, %s129, %s118
        $region20: #{tpu_custom_call.1} parent=15 // pred_fallthru
          _
        // Predicated region
        $region21: #{tpu_custom_call.1} parent=15 // pred_check
          %p132 = pneg %p63
        $region22: #{tpu_custom_call.1} parent=15 // pred_check_branch
          %134 = sbr.rel (%p132) target = $region24
        $region23: #{tpu_custom_call.1} parent=15 // pred_region
          %s135 = sand.u32 %s53, 1
          %s136 = scalar_lea.sflag [#allocation6], %s135
          %s137 = sand.u32 %s53, 1
          %s138 = smul.addr %s137, 8
          %s139 = scalar_lea.vmem [#allocation5], %s138
          %s141 = ssub.s32 128, 128
          %142 = vsyncadd %s136, %s141
          %s143 = smul.addr %s17, 128
          %s144 = scalar_lea.hbm %s1, %s143
          %s146 = sshll.u32 %s139, 4
          %s147 = int_to_ptr.vmem [resolvable:$true] %s146
          %149 = dma.hbm_to_vmem [thread:$0]  %s144, 128, %s147, %s136
        $region24: #{tpu_custom_call.1} parent=15 // pred_fallthru
          _
      $region16: #{tpu_custom_call.1} parent=5 // pred_fallthru
        _
      %p150 = scmp.le.s32.totalorder 1, %s17
      %p151 = scmp.lt.s32.totalorder %s17, 3
      %p152 = pnand %p150, %p151
      %p153 = pneg %p152
      // Predicated region
      $region25: #{tpu_custom_call.1} parent=5 // pred_check
        _
      $region26: #{tpu_custom_call.1} parent=5 // pred_check_branch
        %155 = sbr.rel (%p152) target = $region28
      $region27: #{tpu_custom_call.1} parent=5 // pred_region
        %s156 = ssub.s32 %s17, 1
        %s157 = sand.u32 %s30, 1
        %s158 = scalar_lea.sflag [#allocation3], %s157
        %s159 = sand.u32 %s30, 1
        %s160 = smul.addr %s159, 8
        %s161 = scalar_lea.vmem [#allocation2], %s160
        // Predicated region
        $region29: #{tpu_custom_call.1} parent=27 // pred_check
          %p162 = pneg %p43
        $region30: #{tpu_custom_call.1} parent=27 // pred_check_branch
          %164 = sbr.rel (%p162) target = $region32
        $region31: #{tpu_custom_call.1} parent=27 // pred_region
          %165 = dma.done %s158, 128
        $region32: #{tpu_custom_call.1} parent=27 // pred_fallthru
          _
        %s166 = sand.u32 %s56, 1
        %s167 = scalar_lea.sflag [#allocation6], %s166
        %s168 = sand.u32 %s56, 1
        %s169 = smul.addr %s168, 8
        %s170 = scalar_lea.vmem [#allocation5], %s169
        // Predicated region
        $region33: #{tpu_custom_call.1} parent=27 // pred_check
          %p171 = pneg %p69
        $region34: #{tpu_custom_call.1} parent=27 // pred_check_branch
          %173 = sbr.rel (%p171) target = $region36
        $region35: #{tpu_custom_call.1} parent=27 // pred_region
          %174 = dma.done %s167, 128
        $region36: #{tpu_custom_call.1} parent=27 // pred_fallthru
          _
        %s175 = sand.u32 %s30, 1
        %s176 = scalar_lea.sflag [#allocation3], %s175
        %s177 = sand.u32 %s30, 1
        %s178 = smul.addr %s177, 8
        %s179 = scalar_lea.vmem [#allocation2], %s178
        %p180 = pneg %p43
        %p181 = pneg %p40
        %s182 = sand.u32 %s56, 1
        %s183 = scalar_lea.sflag [#allocation6], %s182
        %s184 = sand.u32 %s56, 1
        %s185 = smul.addr %s184, 8
        %s186 = scalar_lea.vmem [#allocation5], %s185
        %p187 = pneg %p69
        %p188 = pneg %p66
        %p189 = pneg %p95
        %p190 = pneg %p92
        %s191 = sand.u32 %s82, 1
        %s192 = scalar_lea.sflag [#allocation4], %s191
        %s193 = sand.u32 %s82, 1
        %s194 = smul.addr %s193, 16
        %s195 = scalar_lea.vmem [#allocation7], %s194
        %v196 = vld [vmem:[%s161] sm:$0xff]
        %v197 = vld [vmem:[%s170] sm:$0xff]
        %v198 = vmul.f32 %v196, 0.5
        %v199 = vtanh.pop %v198
        %v200 = vadd.f32 %v199, 1.0
        %v201 = vmul.f32 %v200, 0.5
        %v202 = vmul.f32 %v201, %v197
        %v203 = vadd.f32 %v202, 0.0
        %v204 = vadd.f32 %v201, %v197
        %v205 = vadd.f32 %v204, 0.0
        %v206 = vadd.f32 %v203, 0.0
        %v207 = vadd.f32 %v205, 0.0
        %208 = vst [vmem:[%s195] sm:$0xff] %v206
        %s209 = scalar_lea.vmem %s195, 8 [#allocation7]
        %210 = vst [vmem:[%s209] sm:$0xff] %v207
        %s211 = sand.u32 %s82, 1
        %s212 = scalar_lea.sflag [#allocation4], %s211
        %s213 = sand.u32 %s82, 1
        %s214 = smul.addr %s213, 16
        %s215 = scalar_lea.vmem [#allocation7], %s214
        // Predicated region
        $region37: #{tpu_custom_call.1} parent=27 // pred_check
          %p216 = pneg %p92
        $region38: #{tpu_custom_call.1} parent=27 // pred_check_branch
          %218 = sbr.rel (%p216) target = $region40
        $region39: #{tpu_custom_call.1} parent=27 // pred_region
          %s220 = ssub.s32 256, 256
          %221 = vsyncadd %s212, %s220
          %s222 = smul.addr %s22, 2
          %s223 = smul.addr %s222, 128
          %s224 = scalar_lea.hbm %s2, %s223
          %s225 = sshll.u32 %s215, 4
          %s226 = int_to_ptr.vmem [resolvable:$true] %s225
          %231 = dma.vmem_to_hbm [thread:$0]  %s226, 256, %s224, %s212, 128, 128, 8
        $region40: #{tpu_custom_call.1} parent=27 // pred_fallthru
          _
      $region28: #{tpu_custom_call.1} parent=5 // pred_fallthru
        _
      %p232 = scmp.le.s32.totalorder 2, %s17
      // Predicated region
      $region41: #{tpu_custom_call.1} parent=5 // pred_check
        %p233 = pneg %p232
      $region42: #{tpu_custom_call.1} parent=5 // pred_check_branch
        %235 = sbr.rel (%p233) target = $region44
      $region43: #{tpu_custom_call.1} parent=5 // pred_region
        %s236 = ssub.s32 %s17, 2
        // Predicated region
        $region45: #{tpu_custom_call.1} parent=43 // pred_check
          %p237 = pneg %p98
        $region46: #{tpu_custom_call.1} parent=43 // pred_check_branch
          %239 = sbr.rel (%p237) target = $region48
        $region47: #{tpu_custom_call.1} parent=43 // pred_region
          %s240 = sand.u32 %s83, 1
          %s241 = scalar_lea.sflag [#allocation4], %s240
          %s242 = sand.u32 %s83, 1
          %s243 = smul.addr %s242, 16
          %s244 = scalar_lea.vmem [#allocation7], %s243
          %245 = dma.done %s241, 256
        $region48: #{tpu_custom_call.1} parent=43 // pred_fallthru
          _
      $region44: #{tpu_custom_call.1} parent=5 // pred_fallthru
        _
    $region6: #{tpu_custom_call.1} parent=1 // loop_footer
      %s21 = sadd.s32 1, %s17
    $region7: #{tpu_custom_call.1} parent=1 // loop_footer_branch
      %16 = sbr.rel target = $region3
    $region8: #{tpu_custom_call.1} parent=1 // loop_exit
      _
    %246 = vsyncpa [#allocation3], 1
    %s247 = scalar_lea.sflag [#allocation3], 1
    %248 = vsyncpa %s247, 1
    %249 = vsyncpa [#allocation6], 1
    %s250 = scalar_lea.sflag [#allocation6], 1
    %251 = vsyncpa %s250, 1
    %252 = vsyncpa [#allocation4], 1
    %s253 = scalar_lea.sflag [#allocation4], 1
    %254 = vsyncpa %s253, 1

</llo_original>
